<compile_context>
chip_gen: v6e
topology: v6e:2x2x1
jax: 0.10.0
libtpu: 0.0.40
codegen_flags: <defaults>
</compile_context>

<pallas_src>
import functools

import jax
import jax.numpy as jnp
from jax.experimental import pallas as pl
from jax.experimental.pallas import tpu as pltpu

_LANES = 128


def _fold_rows(x, acc_rows):
    """Reduce a (rows, 128) tile to (acc_rows, 128) using vreg-wise VPU adds only."""
    rows, lanes = x.shape
    if rows == acc_rows:
        return x
    return jnp.sum(x.reshape(rows // acc_rows, acc_rows, lanes), axis=0)


def _dice_sums_kernel(logits_ref, tgt_ref, out_ref, *, num_valid, rows, acc_rows,
                      has_tail):
    """Accumulate per-class intersection / cardinality partial sums for one batch item.

    logits_ref: (C, rows, 128) float  -- raw logits, pixels packed as (row, lane)
    tgt_ref:    (rows, 128) int32     -- class index per pixel
    out_ref:    (2, C, acc_rows, 128) f32 resident accumulator block
                out[0] = intersection partials, out[1] = cardinality partials
    num_valid:  static number of valid pixels per batch item (H * W)
    """
    i = pl.program_id(1)

    @pl.when(i == 0)
    def _():
        out_ref[...] = jnp.zeros_like(out_ref)

    x = logits_ref[...].astype(jnp.float32)          # (C, rows, 128)
    tgt = tgt_ref[...]                               # (rows, 128)
    num_classes = x.shape[0]

    # Per-pixel softmax over the (small, leading) class axis: element-wise per
    # pixel vreg -> VPU + EUP only, no cross-lane/cross-sublane reductions.
    m = jnp.max(x, axis=0)                           # (rows, 128)
    e = jnp.exp(x - m[None, :, :])                   # (C, rows, 128)
    denom = jnp.sum(e, axis=0)                       # (rows, 128)
    inv = pl.reciprocal(denom, approx=True)          # EUP vrcp

    def accumulate(valid):
        for c in range(num_classes):
            p_c = e[c] * inv                          # probs for class c
            sel = tgt == c
            if valid is not None:
                p_c = jnp.where(valid, p_c, 0.0)
                sel = jnp.logical_and(sel, valid)
            inter_c = jnp.where(sel, p_c, 0.0)                 # probs * onehot
            card_c = p_c + jnp.where(sel, 1.0, 0.0)            # probs + onehot
            out_ref[0, c, :, :] += _fold_rows(inter_c, acc_rows)
            out_ref[1, c, :, :] += _fold_rows(card_c, acc_rows)

    if has_tail:
        last = pl.num_programs(1) - 1

        @pl.when(i != last)
        def _():
            accumulate(None)                          # full tiles: no masking cost

        @pl.when(i == last)
        def _():
            row = jax.lax.broadcasted_iota(jnp.int32, (rows, _LANES), 0)
            lane = jax.lax.broadcasted_iota(jnp.int32, (rows, _LANES), 1)
            pix = (i * rows + row) * _LANES + lane
            accumulate(pix < num_valid)
    else:
        accumulate(None)


def _pick_rows(total_rows, num_classes):
    """Rows-per-tile so the f32 working block (C * rows * 128 * 4B) is ~2 MiB;
    multiple of 8 (sublane alignment) unless a single tile covers everything."""
    budget = 2 * 1024 * 1024
    rows = budget // (num_classes * _LANES * 4)
    rows = max(8, (rows // 8) * 8)
    return total_rows if rows >= total_rows else rows


@functools.partial(jax.jit, static_argnames=("eps", "rows_per_tile"))
def dice_loss(prediction, target, eps=1e-07, rows_per_tile=None):
    """Pallas equivalent of Dice.forward.

    prediction: (N, C, H, W) float logits (f32 or bf16)
    target:     (N, 1, H, W) integer class indices
    returns:    scalar float32 loss = 1 - mean_c dice_c
    """
    N, C, H, W = prediction.shape
    HW = H * W
    R = pl.cdiv(HW, _LANES)            # pixel rows after lane packing
    HW_pad = R * _LANES

    logits = prediction.reshape(N, C, HW)
    tgt = target.astype(jnp.int32).reshape(N, HW)
    if HW_pad != HW:
        # TODO(synk): a flat-lane fallback path would avoid this pad copy for
        # ragged H*W; padded pixels are masked out in the kernel's last tile.
        logits = jnp.pad(logits, ((0, 0), (0, 0), (0, HW_pad - HW)))
        tgt = jnp.pad(tgt, ((0, 0), (0, HW_pad - HW)))
    logits = logits.reshape(N, C, R, _LANES)
    tgt = tgt.reshape(N, R, _LANES)

    rows = _pick_rows(R, C) if rows_per_tile is None else rows_per_tile
    n_tiles = pl.cdiv(R, rows)
    acc_rows = 8 if rows % 8 == 0 else rows
    has_tail = (HW != HW_pad) or (R % rows != 0)

    kernel = functools.partial(
        _dice_sums_kernel, num_valid=HW, rows=rows, acc_rows=acc_rows,
        has_tail=has_tail)

    sums = pl.pallas_call(
        kernel,
        out_shape=jax.ShapeDtypeStruct((N, 2, C, acc_rows, _LANES), jnp.float32),
        grid_spec=pltpu.PrefetchScalarGridSpec(
            num_scalar_prefetch=0,
            grid=(N, n_tiles),
            in_specs=[
                pl.BlockSpec((None, C, rows, _LANES), lambda n, i: (n, 0, i, 0)),
                pl.BlockSpec((None, rows, _LANES), lambda n, i: (n, i, 0)),
            ],
            out_specs=pl.BlockSpec((None, 2, C, acc_rows, _LANES),
                                   lambda n, i: (n, 0, 0, 0, 0)),
        ),
        compiler_params=pltpu.CompilerParams(
            dimension_semantics=("parallel", "arbitrary"),
            vmem_limit_bytes=32 * 1024 * 1024,
        ),
    )(logits, tgt)

    intersection = jnp.sum(sums[:, 0], axis=(0, 2, 3))   # (C,)
    cardinality = jnp.sum(sums[:, 1], axis=(0, 2, 3))    # (C,)
    dice_coeff = jnp.mean(2.0 * intersection / (cardinality + eps))
    return 1.0 - dice_coeff


def _dice_loss_reference(prediction, target, eps=1e-07):
    """Pure-JAX reference mirroring the PyTorch module exactly."""
    num_classes = prediction.shape[1]
    probs = jax.nn.softmax(prediction.astype(jnp.float32), axis=1)
    tgt = jnp.squeeze(target.astype(jnp.int32), axis=1)                 # (N, H, W)
    onehot = jax.nn.one_hot(tgt, num_classes, dtype=jnp.float32)        # (N, H, W, C)
    onehot = jnp.transpose(onehot, (0, 3, 1, 2))                        # (N, C, H, W)
    dims = (0, 2, 3)
    intersection = jnp.sum(probs * onehot, axis=dims)
    cardinality = jnp.sum(probs + onehot, axis=dims)
    dice_coeff = jnp.mean(2.0 * intersection / (cardinality + eps))
    return 1.0 - dice_coeff


if __name__ == "__main__":
    key = jax.random.PRNGKey(0)
    k1, k2, k3, k4, k5, k6 = jax.random.split(key, 6)

    # Test 1: f32, pixel count a multiple of 128 (no pad, no masking, single tile).
    N, C, H, W = 2, 4, 16, 16
    pred1 = jax.random.normal(k1, (N, C, H, W), dtype=jnp.float32)
    tgt1 = jax.random.randint(k2, (N, 1, H, W), 0, C, dtype=jnp.int32)
    loss1 = jax.block_until_ready(dice_loss(pred1, tgt1))
    ref1 = _dice_loss_reference(pred1, tgt1)
    assert jnp.allclose(loss1, ref1, atol=2e-3, rtol=2e-3), (loss1, ref1)

    # Test 2: bf16 logits + ragged pixel tail (HW=160 padded to 256, lane masking).
    H2, W2 = 16, 10
    pred2 = jax.random.normal(k3, (N, C, H2, W2), dtype=jnp.bfloat16)
    tgt2 = jax.random.randint(k4, (N, 1, H2, W2), 0, C, dtype=jnp.int32)
    loss2 = jax.block_until_ready(dice_loss(pred2, tgt2))
    ref2 = _dice_loss_reference(pred2, tgt2)
    assert jnp.allclose(loss2, ref2, atol=2e-3, rtol=2e-3), (loss2, ref2)

    # Test 3: multi-tile reduction + row/lane tail masking (tiny rows_per_tile
    # override so the grid has >1 pixel tile even at small test shapes).
    N3, C3, H3, W3 = 1, 3, 40, 40
    pred3 = jax.random.normal(k5, (N3, C3, H3, W3), dtype=jnp.float32)
    tgt3 = jax.random.randint(k6, (N3, 1, H3, W3), 0, C3, dtype=jnp.int32)
    loss3 = jax.block_until_ready(dice_loss(pred3, tgt3, rows_per_tile=8))
    ref3 = _dice_loss_reference(pred3, tgt3)
    assert jnp.allclose(loss3, ref3, atol=2e-3, rtol=2e-3), (loss3, ref3)

    print("KERNEL_OK")
</pallas_src>

<mosaic_0001>
module attributes {stable_mosaic.version = 11 : i64} {
  func.func @_dice_sums_kernel(%arg0: i32, %arg1: i32, %arg2: memref<1x4x2x128xf32, #tpu.memory_space<vmem>>, %arg3: memref<1x2x128xi32, #tpu.memory_space<vmem>>, %arg4: memref<1x2x4x2x128xf32, #tpu.memory_space<vmem>>) attributes {dimension_semantics = [#tpu.dimension_semantics<parallel>, #tpu.dimension_semantics<arbitrary>], iteration_bounds = array<i64: 2, 1>, scalar_prefetch = 0 : i64, scratch_operands = 0 : i64, tpu.core_type = #tpu.core_type<tc>, window_params = [{transform_indices = @transform_0, window_bounds = array<i64: 1, 4, 2, 128>}, {transform_indices = @transform_1, window_bounds = array<i64: 1, 2, 128>}, {transform_indices = @transform_2, window_bounds = array<i64: 1, 2, 4, 2, 128>}]} {
    %c0_i32 = arith.constant 0 : i32
    %0 = arith.cmpi eq, %arg1, %c0_i32 : i32
    %1 = arith.extui %0 : i1 to i32
    %c0_i32_0 = arith.constant 0 : i32
    %2 = arith.cmpi ne, %1, %c0_i32_0 : i32
    scf.if %2 {
      %cst_98 = arith.constant 0.000000e+00 : f32
      %106 = vector.broadcast %cst_98 : f32 to vector<2x4x2x128xf32>
      %c0_99 = arith.constant 0 : index
      %c0_100 = arith.constant 0 : index
      %c0_101 = arith.constant 0 : index
      %c0_102 = arith.constant 0 : index
      %c0_103 = arith.constant 0 : index
      %107 = vector.load %arg4[%c0_99, %c0_100, %c0_101, %c0_102, %c0_103] : memref<1x2x4x2x128xf32, #tpu.memory_space<vmem>>, vector<1x2x4x2x128xf32>
      %108 = vector.shape_cast %107 : vector<1x2x4x2x128xf32> to vector<2x4x2x128xf32>
      %109 = vector.shape_cast %106 : vector<2x4x2x128xf32> to vector<1x2x4x2x128xf32>
      tpu.vector_store %arg4[%c0_99, %c0_100, %c0_101, %c0_102, %c0_103], %109 {strides = array<i32>} : memref<1x2x4x2x128xf32, #tpu.memory_space<vmem>>, vector<1x2x4x2x128xf32>,
    } else {
    }
    %c0 = arith.constant 0 : index
    %c0_1 = arith.constant 0 : index
    %c0_2 = arith.constant 0 : index
    %c0_3 = arith.constant 0 : index
    %3 = vector.load %arg2[%c0, %c0_1, %c0_2, %c0_3] : memref<1x4x2x128xf32, #tpu.memory_space<vmem>>, vector<1x4x2x128xf32>
    %4 = vector.shape_cast %3 : vector<1x4x2x128xf32> to vector<4x2x128xf32>
    %c0_4 = arith.constant 0 : index
    %c0_5 = arith.constant 0 : index
    %c0_6 = arith.constant 0 : index
    %5 = vector.load %arg3[%c0_4, %c0_5, %c0_6] : memref<1x2x128xi32, #tpu.memory_space<vmem>>, vector<1x2x128xi32>
    %6 = vector.shape_cast %5 : vector<1x2x128xi32> to vector<2x128xi32>
    %cst = arith.constant dense<0xFF800000> : vector<2x128xf32>
    %7 = vector.multi_reduction <maximumf>, %4, %cst [0] : vector<4x2x128xf32> to vector<2x128xf32>
    %8 = vector.shape_cast %7 : vector<2x128xf32> to vector<1x2x128xf32>
    %9 = vector.broadcast %8 : vector<1x2x128xf32> to vector<4x2x128xf32>
    %10 = arith.subf %4, %9 : vector<4x2x128xf32>
    %11 = math.exp %10 : vector<4x2x128xf32>
    %cst_7 = arith.constant dense<0.000000e+00> : vector<2x128xf32>
    %12 = vector.multi_reduction <add>, %11, %cst_7 [0] : vector<4x2x128xf32> to vector<2x128xf32>
    %13 = tpu.reciprocal %12 {approx = true} : vector<2x128xf32> -> vector<2x128xf32>
    %14 = vector.extract_strided_slice %11 {offsets = [0, 0, 0], sizes = [1, 2, 128], strides = [1, 1, 1]} : vector<4x2x128xf32> to vector<1x2x128xf32>
    %15 = vector.shape_cast %14 : vector<1x2x128xf32> to vector<2x128xf32>
    %16 = arith.mulf %15, %13 : vector<2x128xf32>
    %c0_i32_8 = arith.constant 0 : i32
    %17 = vector.broadcast %c0_i32_8 : i32 to vector<2x128xi32>
    %18 = arith.cmpi eq, %6, %17 : vector<2x128xi32>
    %cst_9 = arith.constant 0.000000e+00 : f32
    %19 = vector.broadcast %cst_9 : f32 to vector<2x128xf32>
    %20 = arith.select %18, %16, %19 : vector<2x128xi1>, vector<2x128xf32>
    %cst_10 = arith.constant 1.000000e+00 : f32
    %cst_11 = arith.constant 0.000000e+00 : f32
    %21 = vector.broadcast %cst_10 : f32 to vector<2x128xf32>
    %22 = vector.broadcast %cst_11 : f32 to vector<2x128xf32>
    %23 = arith.select %18, %21, %22 : vector<2x128xi1>, vector<2x128xf32>
    %24 = arith.addf %16, %23 : vector<2x128xf32>
    %c0_12 = arith.constant 0 : index
    %c0_13 = arith.constant 0 : index
    %c0_14 = arith.constant 0 : index
    %c0_15 = arith.constant 0 : index
    %c0_16 = arith.constant 0 : index
    %25 = vector.load %arg4[%c0_12, %c0_13, %c0_14, %c0_15, %c0_16] : memref<1x2x4x2x128xf32, #tpu.memory_space<vmem>>, vector<1x1x1x2x128xf32>
    %26 = vector.shape_cast %25 : vector<1x1x1x2x128xf32> to vector<2x128xf32>
    %27 = arith.addf %26, %20 : vector<2x128xf32>
    %c0_17 = arith.constant 0 : index
    %c0_18 = arith.constant 0 : index
    %c0_19 = arith.constant 0 : index
    %c0_20 = arith.constant 0 : index
    %c0_21 = arith.constant 0 : index
    %28 = vector.load %arg4[%c0_17, %c0_18, %c0_19, %c0_20, %c0_21] : memref<1x2x4x2x128xf32, #tpu.memory_space<vmem>>, vector<1x1x1x2x128xf32>
    %29 = vector.shape_cast %28 : vector<1x1x1x2x128xf32> to vector<2x128xf32>
    %30 = vector.shape_cast %27 : vector<2x128xf32> to vector<1x1x1x2x128xf32>
    tpu.vector_store %arg4[%c0_17, %c0_18, %c0_19, %c0_20, %c0_21], %30 {strides = array<i32>} : memref<1x2x4x2x128xf32, #tpu.memory_space<vmem>>, vector<1x1x1x2x128xf32>,
    %c0_22 = arith.constant 0 : index
    %c1 = arith.constant 1 : index
    %c0_23 = arith.constant 0 : index
    %c0_24 = arith.constant 0 : index
    %c0_25 = arith.constant 0 : index
    %31 = vector.load %arg4[%c0_22, %c1, %c0_23, %c0_24, %c0_25] : memref<1x2x4x2x128xf32, #tpu.memory_space<vmem>>, vector<1x1x1x2x128xf32>
    %32 = vector.shape_cast %31 : vector<1x1x1x2x128xf32> to vector<2x128xf32>
    %33 = arith.addf %32, %24 : vector<2x128xf32>
    %c0_26 = arith.constant 0 : index
    %c1_27 = arith.constant 1 : index
    %c0_28 = arith.constant 0 : index
    %c0_29 = arith.constant 0 : index
    %c0_30 = arith.constant 0 : index
    %34 = vector.load %arg4[%c0_26, %c1_27, %c0_28, %c0_29, %c0_30] : memref<1x2x4x2x128xf32, #tpu.memory_space<vmem>>, vector<1x1x1x2x128xf32>
    %35 = vector.shape_cast %34 : vector<1x1x1x2x128xf32> to vector<2x128xf32>
    %36 = vector.shape_cast %33 : vector<2x128xf32> to vector<1x1x1x2x128xf32>
    tpu.vector_store %arg4[%c0_26, %c1_27, %c0_28, %c0_29, %c0_30], %36 {strides = array<i32>} : memref<1x2x4x2x128xf32, #tpu.memory_space<vmem>>, vector<1x1x1x2x128xf32>,
    %37 = vector.extract_strided_slice %11 {offsets = [1, 0, 0], sizes = [1, 2, 128], strides = [1, 1, 1]} : vector<4x2x128xf32> to vector<1x2x128xf32>
    %38 = vector.shape_cast %37 : vector<1x2x128xf32> to vector<2x128xf32>
    %39 = arith.mulf %38, %13 : vector<2x128xf32>
    %c1_i32 = arith.constant 1 : i32
    %40 = vector.broadcast %c1_i32 : i32 to vector<2x128xi32>
    %41 = arith.cmpi eq, %6, %40 : vector<2x128xi32>
    %cst_31 = arith.constant 0.000000e+00 : f32
    %42 = vector.broadcast %cst_31 : f32 to vector<2x128xf32>
    %43 = arith.select %41, %39, %42 : vector<2x128xi1>, vector<2x128xf32>
    %cst_32 = arith.constant 1.000000e+00 : f32
    %cst_33 = arith.constant 0.000000e+00 : f32
    %44 = vector.broadcast %cst_32 : f32 to vector<2x128xf32>
    %45 = vector.broadcast %cst_33 : f32 to vector<2x128xf32>
    %46 = arith.select %41, %44, %45 : vector<2x128xi1>, vector<2x128xf32>
    %47 = arith.addf %39, %46 : vector<2x128xf32>
    %c0_34 = arith.constant 0 : index
    %c0_35 = arith.constant 0 : index
    %c1_36 = arith.constant 1 : index
    %c0_37 = arith.constant 0 : index
    %c0_38 = arith.constant 0 : index
    %48 = vector.load %arg4[%c0_34, %c0_35, %c1_36, %c0_37, %c0_38] : memref<1x2x4x2x128xf32, #tpu.memory_space<vmem>>, vector<1x1x1x2x128xf32>
    %49 = vector.shape_cast %48 : vector<1x1x1x2x128xf32> to vector<2x128xf32>
    %50 = arith.addf %49, %43 : vector<2x128xf32>
    %c0_39 = arith.constant 0 : index
    %c0_40 = arith.constant 0 : index
    %c1_41 = arith.constant 1 : index
    %c0_42 = arith.constant 0 : index
    %c0_43 = arith.constant 0 : index
    %51 = vector.load %arg4[%c0_39, %c0_40, %c1_41, %c0_42, %c0_43] : memref<1x2x4x2x128xf32, #tpu.memory_space<vmem>>, vector<1x1x1x2x128xf32>
    %52 = vector.shape_cast %51 : vector<1x1x1x2x128xf32> to vector<2x128xf32>
    %53 = vector.shape_cast %50 : vector<2x128xf32> to vector<1x1x1x2x128xf32>
    tpu.vector_store %arg4[%c0_39, %c0_40, %c1_41, %c0_42, %c0_43], %53 {strides = array<i32>} : memref<1x2x4x2x128xf32, #tpu.memory_space<vmem>>, vector<1x1x1x2x128xf32>,
    %c0_44 = arith.constant 0 : index
    %c1_45 = arith.constant 1 : index
    %c1_46 = arith.constant 1 : index
    %c0_47 = arith.constant 0 : index
    %c0_48 = arith.constant 0 : index
    %54 = vector.load %arg4[%c0_44, %c1_45, %c1_46, %c0_47, %c0_48] : memref<1x2x4x2x128xf32, #tpu.memory_space<vmem>>, vector<1x1x1x2x128xf32>
    %55 = vector.shape_cast %54 : vector<1x1x1x2x128xf32> to vector<2x128xf32>
    %56 = arith.addf %55, %47 : vector<2x128xf32>
    %c0_49 = arith.constant 0 : index
    %c1_50 = arith.constant 1 : index
    %c1_51 = arith.constant 1 : index
    %c0_52 = arith.constant 0 : index
    %c0_53 = arith.constant 0 : index
    %57 = vector.load %arg4[%c0_49, %c1_50, %c1_51, %c0_52, %c0_53] : memref<1x2x4x2x128xf32, #tpu.memory_space<vmem>>, vector<1x1x1x2x128xf32>
    %58 = vector.shape_cast %57 : vector<1x1x1x2x128xf32> to vector<2x128xf32>
    %59 = vector.shape_cast %56 : vector<2x128xf32> to vector<1x1x1x2x128xf32>
    tpu.vector_store %arg4[%c0_49, %c1_50, %c1_51, %c0_52, %c0_53], %59 {strides = array<i32>} : memref<1x2x4x2x128xf32, #tpu.memory_space<vmem>>, vector<1x1x1x2x128xf32>,
    %60 = vector.extract_strided_slice %11 {offsets = [2, 0, 0], sizes = [1, 2, 128], strides = [1, 1, 1]} : vector<4x2x128xf32> to vector<1x2x128xf32>
    %61 = vector.shape_cast %60 : vector<1x2x128xf32> to vector<2x128xf32>
    %62 = arith.mulf %61, %13 : vector<2x128xf32>
    %c2_i32 = arith.constant 2 : i32
    %63 = vector.broadcast %c2_i32 : i32 to vector<2x128xi32>
    %64 = arith.cmpi eq, %6, %63 : vector<2x128xi32>
    %cst_54 = arith.constant 0.000000e+00 : f32
    %65 = vector.broadcast %cst_54 : f32 to vector<2x128xf32>
    %66 = arith.select %64, %62, %65 : vector<2x128xi1>, vector<2x128xf32>
    %cst_55 = arith.constant 1.000000e+00 : f32
    %cst_56 = arith.constant 0.000000e+00 : f32
    %67 = vector.broadcast %cst_55 : f32 to vector<2x128xf32>
    %68 = vector.broadcast %cst_56 : f32 to vector<2x128xf32>
    %69 = arith.select %64, %67, %68 : vector<2x128xi1>, vector<2x128xf32>
    %70 = arith.addf %62, %69 : vector<2x128xf32>
    %c0_57 = arith.constant 0 : index
    %c0_58 = arith.constant 0 : index
    %c2 = arith.constant 2 : index
    %c0_59 = arith.constant 0 : index
    %c0_60 = arith.constant 0 : index
    %71 = vector.load %arg4[%c0_57, %c0_58, %c2, %c0_59, %c0_60] : memref<1x2x4x2x128xf32, #tpu.memory_space<vmem>>, vector<1x1x1x2x128xf32>
    %72 = vector.shape_cast %71 : vector<1x1x1x2x128xf32> to vector<2x128xf32>
    %73 = arith.addf %72, %66 : vector<2x128xf32>
    %c0_61 = arith.constant 0 : index
    %c0_62 = arith.constant 0 : index
    %c2_63 = arith.constant 2 : index
    %c0_64 = arith.constant 0 : index
    %c0_65 = arith.constant 0 : index
    %74 = vector.load %arg4[%c0_61, %c0_62, %c2_63, %c0_64, %c0_65] : memref<1x2x4x2x128xf32, #tpu.memory_space<vmem>>, vector<1x1x1x2x128xf32>
    %75 = vector.shape_cast %74 : vector<1x1x1x2x128xf32> to vector<2x128xf32>
    %76 = vector.shape_cast %73 : vector<2x128xf32> to vector<1x1x1x2x128xf32>
    tpu.vector_store %arg4[%c0_61, %c0_62, %c2_63, %c0_64, %c0_65], %76 {strides = array<i32>} : memref<1x2x4x2x128xf32, #tpu.memory_space<vmem>>, vector<1x1x1x2x128xf32>,
    %c0_66 = arith.constant 0 : index
    %c1_67 = arith.constant 1 : index
    %c2_68 = arith.constant 2 : index
    %c0_69 = arith.constant 0 : index
    %c0_70 = arith.constant 0 : index
    %77 = vector.load %arg4[%c0_66, %c1_67, %c2_68, %c0_69, %c0_70] : memref<1x2x4x2x128xf32, #tpu.memory_space<vmem>>, vector<1x1x1x2x128xf32>
    %78 = vector.shape_cast %77 : vector<1x1x1x2x128xf32> to vector<2x128xf32>
    %79 = arith.addf %78, %70 : vector<2x128xf32>
    %c0_71 = arith.constant 0 : index
    %c1_72 = arith.constant 1 : index
    %c2_73 = arith.constant 2 : index
    %c0_74 = arith.constant 0 : index
    %c0_75 = arith.constant 0 : index
    %80 = vector.load %arg4[%c0_71, %c1_72, %c2_73, %c0_74, %c0_75] : memref<1x2x4x2x128xf32, #tpu.memory_space<vmem>>, vector<1x1x1x2x128xf32>
    %81 = vector.shape_cast %80 : vector<1x1x1x2x128xf32> to vector<2x128xf32>
    %82 = vector.shape_cast %79 : vector<2x128xf32> to vector<1x1x1x2x128xf32>
    tpu.vector_store %arg4[%c0_71, %c1_72, %c2_73, %c0_74, %c0_75], %82 {strides = array<i32>} : memref<1x2x4x2x128xf32, #tpu.memory_space<vmem>>, vector<1x1x1x2x128xf32>,
    %83 = vector.extract_strided_slice %11 {offsets = [3, 0, 0], sizes = [1, 2, 128], strides = [1, 1, 1]} : vector<4x2x128xf32> to vector<1x2x128xf32>
    %84 = vector.shape_cast %83 : vector<1x2x128xf32> to vector<2x128xf32>
    %85 = arith.mulf %84, %13 : vector<2x128xf32>
    %c3_i32 = arith.constant 3 : i32
    %86 = vector.broadcast %c3_i32 : i32 to vector<2x128xi32>
    %87 = arith.cmpi eq, %6, %86 : vector<2x128xi32>
    %cst_76 = arith.constant 0.000000e+00 : f32
    %88 = vector.broadcast %cst_76 : f32 to vector<2x128xf32>
    %89 = arith.select %87, %85, %88 : vector<2x128xi1>, vector<2x128xf32>
    %cst_77 = arith.constant 1.000000e+00 : f32
    %cst_78 = arith.constant 0.000000e+00 : f32
    %90 = vector.broadcast %cst_77 : f32 to vector<2x128xf32>
    %91 = vector.broadcast %cst_78 : f32 to vector<2x128xf32>
    %92 = arith.select %87, %90, %91 : vector<2x128xi1>, vector<2x128xf32>
    %93 = arith.addf %85, %92 : vector<2x128xf32>
    %c0_79 = arith.constant 0 : index
    %c0_80 = arith.constant 0 : index
    %c3 = arith.constant 3 : index
    %c0_81 = arith.constant 0 : index
    %c0_82 = arith.constant 0 : index
    %94 = vector.load %arg4[%c0_79, %c0_80, %c3, %c0_81, %c0_82] : memref<1x2x4x2x128xf32, #tpu.memory_space<vmem>>, vector<1x1x1x2x128xf32>
    %95 = vector.shape_cast %94 : vector<1x1x1x2x128xf32> to vector<2x128xf32>
    %96 = arith.addf %95, %89 : vector<2x128xf32>
    %c0_83 = arith.constant 0 : index
    %c0_84 = arith.constant 0 : index
    %c3_85 = arith.constant 3 : index
    %c0_86 = arith.constant 0 : index
    %c0_87 = arith.constant 0 : index
    %97 = vector.load %arg4[%c0_83, %c0_84, %c3_85, %c0_86, %c0_87] : memref<1x2x4x2x128xf32, #tpu.memory_space<vmem>>, vector<1x1x1x2x128xf32>
    %98 = vector.shape_cast %97 : vector<1x1x1x2x128xf32> to vector<2x128xf32>
    %99 = vector.shape_cast %96 : vector<2x128xf32> to vector<1x1x1x2x128xf32>
    tpu.vector_store %arg4[%c0_83, %c0_84, %c3_85, %c0_86, %c0_87], %99 {strides = array<i32>} : memref<1x2x4x2x128xf32, #tpu.memory_space<vmem>>, vector<1x1x1x2x128xf32>,
    %c0_88 = arith.constant 0 : index
    %c1_89 = arith.constant 1 : index
    %c3_90 = arith.constant 3 : index
    %c0_91 = arith.constant 0 : index
    %c0_92 = arith.constant 0 : index
    %100 = vector.load %arg4[%c0_88, %c1_89, %c3_90, %c0_91, %c0_92] : memref<1x2x4x2x128xf32, #tpu.memory_space<vmem>>, vector<1x1x1x2x128xf32>
    %101 = vector.shape_cast %100 : vector<1x1x1x2x128xf32> to vector<2x128xf32>
    %102 = arith.addf %101, %93 : vector<2x128xf32>
    %c0_93 = arith.constant 0 : index
    %c1_94 = arith.constant 1 : index
    %c3_95 = arith.constant 3 : index
    %c0_96 = arith.constant 0 : index
    %c0_97 = arith.constant 0 : index
    %103 = vector.load %arg4[%c0_93, %c1_94, %c3_95, %c0_96, %c0_97] : memref<1x2x4x2x128xf32, #tpu.memory_space<vmem>>, vector<1x1x1x2x128xf32>
    %104 = vector.shape_cast %103 : vector<1x1x1x2x128xf32> to vector<2x128xf32>
    %105 = vector.shape_cast %102 : vector<2x128xf32> to vector<1x1x1x2x128xf32>
    tpu.vector_store %arg4[%c0_93, %c1_94, %c3_95, %c0_96, %c0_97], %105 {strides = array<i32>} : memref<1x2x4x2x128xf32, #tpu.memory_space<vmem>>, vector<1x1x1x2x128xf32>,
    return
  }
  func.func @transform_0(%arg0: i32, %arg1: i32) -> (i32, i32, i32, i32) {
    %c0_i32 = arith.constant 0 : i32
    %c0_i32_0 = arith.constant 0 : i32
    %c0_i32_1 = arith.constant 0 : i32
    return %arg0, %c0_i32, %arg1, %c0_i32_0 : i32, i32, i32, i32
  }
  func.func @transform_1(%arg0: i32, %arg1: i32) -> (i32, i32, i32) {
    %c0_i32 = arith.constant 0 : i32
    %c0_i32_0 = arith.constant 0 : i32
    return %arg0, %arg1, %c0_i32 : i32, i32, i32
  }
  func.func @transform_2(%arg0: i32, %arg1: i32) -> (i32, i32, i32, i32, i32) {
    %c0_i32 = arith.constant 0 : i32
    %c0_i32_0 = arith.constant 0 : i32
    %c0_i32_1 = arith.constant 0 : i32
    %c0_i32_2 = arith.constant 0 : i32
    %c0_i32_3 = arith.constant 0 : i32
    return %arg0, %c0_i32, %c0_i32_0, %c0_i32_1, %c0_i32_2 : i32, i32, i32, i32, i32
  }
}

</mosaic_0001>

<llo_original>
// kernel: dice_loss.1
$region0: #{dice_loss.1}
  #allocation0 [shape = 'u32[]', space=smem, size = 0x4, offset = 0x4, fixed_abs, tag = 'smem constant byte address 0x4 - core index']
  #allocation1 [shape = 'u32[144,128]{1,0:T(1,128)}', space=vmem, size = 0x12000, scoped, tag = 'internal scratch']
  %s0 = inlined_call_operand.vmem [shape: f32[2,4,2,128], index: 0, kind: input, shape index: {}]
  %s1 = inlined_call_operand.vmem [shape: s32[2,2,128], index: 1, kind: input, shape index: {}]
  %s2 = inlined_call_operand.vmem [shape: f32[2,2,4,2,128], index: 2, kind: output, shape index: {}]
  %s3 = sld [smem:[#allocation0]]
  $region45: #{dice_loss.1} parent=0
    _
  %s5 = ssub.s32 1, %s3
  %s6 = scalar_select 0, %s5, %s3
  loop: start=0, step=1, limit=4
  $region2: #{dice_loss.1} parent=0 // loop_pre_header
    _
  $region3: #{dice_loss.1} parent=0 // loop_header
    %s8 = sphi 0, %s12
    %p9 = scmp.ge.s32.totalorder %s8, 4
    %s15 = sphi 0, %s27
    %s16 = sphi 0, %s23
    %s17 = sphi 0, %s15
    %s18 = sphi 0, %s16
    %s19 = sphi 0, %s17
    %s20 = sphi 0, %s18
    %s32 = sphi 0, %s34
    %s35 = sphi 0, %s32
    %s36 = sphi 0, %s35
    %s52 = sphi 0, %s36
    %s60 = sphi 0, %s62
    %s63 = sphi 0, %s60
    %s64 = sphi 0, %s63
    %s80 = sphi 0, %s64
    %s86 = sphi 0, %s88
    %s89 = sphi 0, %s86
    %s90 = sphi 0, %s89
    %s106 = sphi 0, %s90
  $region4: #{dice_loss.1} parent=0 // loop_header_branch
    %11 = sbr.rel (%p9) target = $region8
  $region5: #{dice_loss.1} parent=0 // loop_body
    %s13 = ssub.s32 %s8, 1
    %s14 = ssub.s32 %s8, 2
    %s21 = sadd.s32 1, %s16
    %p22 = scmp.ge.s32.totalorder %s21, 1
    %s23 = scalar_select %p22, 0, %s21
    %s24 = sadd.s32 1, %s15
    %s25 = scalar_select %p22, %s24, %s15
    %p26 = scmp.ge.s32.totalorder %s25, 2
    %s27 = scalar_select %p26, 0, %s25
    %s28 = ssub.s32 %s15, %s27
    %s29 = ssub.s32 %s16, %s23
    %s30 = sor.u32 %s28, %s29
    %p31 = scmp.eq.s32.totalorder %s30, 0
    %s33 = sadd.s32 %s32, 1
    %s34 = scalar_select %p31, %s32, %s33
    %p37 = pneg %p31
    %p38 = scmp.eq.s32.totalorder %s8, 1
    %p39 = por %p37, %p38
    %p40 = scmp.ne.s32.totalorder %s32, %s35
    %p41 = scmp.eq.s32.totalorder %s8, 0
    %p42 = por %p40, %p41
    %p43 = scmp.ne.s32.totalorder %s32, %s35
    %p44 = scmp.eq.s32.totalorder %s13, 1
    %p45 = por %p43, %p44
    %p46 = scmp.ne.s32.totalorder %s35, %s36
    %p47 = scmp.eq.s32.totalorder %s13, 0
    %p48 = por %p46, %p47
    %p49 = scmp.ne.s32.totalorder %s35, %s36
    %p50 = scmp.eq.s32.totalorder %s14, 1
    %p51 = por %p49, %p50
    %p53 = scmp.ne.s32.totalorder %s36, %s52
    %p54 = scmp.eq.s32.totalorder %s14, 0
    %p55 = por %p53, %p54
    %s56 = ssub.s32 %s15, %s27
    %s57 = ssub.s32 %s16, %s23
    %s58 = sor.u32 %s56, %s57
    %p59 = scmp.eq.s32.totalorder %s58, 0
    %s61 = sadd.s32 %s60, 1
    %s62 = scalar_select %p59, %s60, %s61
    %p65 = pneg %p59
    %p66 = scmp.eq.s32.totalorder %s8, 1
    %p67 = por %p65, %p66
    %p68 = scmp.ne.s32.totalorder %s60, %s63
    %p69 = scmp.eq.s32.totalorder %s8, 0
    %p70 = por %p68, %p69
    %p71 = scmp.ne.s32.totalorder %s60, %s63
    %p72 = scmp.eq.s32.totalorder %s13, 1
    %p73 = por %p71, %p72
    %p74 = scmp.ne.s32.totalorder %s63, %s64
    %p75 = scmp.eq.s32.totalorder %s13, 0
    %p76 = por %p74, %p75
    %p77 = scmp.ne.s32.totalorder %s63, %s64
    %p78 = scmp.eq.s32.totalorder %s14, 1
    %p79 = por %p77, %p78
    %p81 = scmp.ne.s32.totalorder %s64, %s80
    %p82 = scmp.eq.s32.totalorder %s14, 0
    %p83 = por %p81, %p82
    %s84 = ssub.s32 %s15, %s27
    %p85 = scmp.eq.s32.totalorder %s84, 0
    %s87 = sadd.s32 %s86, 1
    %s88 = scalar_select %p85, %s86, %s87
    %p91 = pneg %p85
    %p92 = scmp.eq.s32.totalorder %s8, 1
    %p93 = por %p91, %p92
    %p94 = scmp.ne.s32.totalorder %s86, %s89
    %p95 = scmp.eq.s32.totalorder %s8, 0
    %p96 = por %p94, %p95
    %p97 = scmp.ne.s32.totalorder %s86, %s89
    %p98 = scmp.eq.s32.totalorder %s13, 1
    %p99 = por %p97, %p98
    %p100 = scmp.ne.s32.totalorder %s89, %s90
    %p101 = scmp.eq.s32.totalorder %s13, 0
    %p102 = por %p100, %p101
    %p103 = scmp.ne.s32.totalorder %s89, %s90
    %p104 = scmp.eq.s32.totalorder %s14, 1
    %p105 = por %p103, %p104
    %p107 = scmp.ne.s32.totalorder %s90, %s106
    %p108 = scmp.eq.s32.totalorder %s14, 0
    %p109 = por %p107, %p108
    %p110 = scmp.le.s32.totalorder 1, %s8
    %p111 = scmp.lt.s32.totalorder %s8, 3
    %p112 = pnand %p110, %p111
    %p113 = pneg %p112
    // Predicated region
    $region9: #{dice_loss.1} parent=5 // pred_check
      _
    $region10: #{dice_loss.1} parent=5 // pred_check_branch
      %115 = sbr.rel (%p112) target = $region12
    $region11: #{dice_loss.1} parent=5 // pred_region
      %s116 = ssub.s32 %s8, 1
    $region12: #{dice_loss.1} parent=5 // pred_fallthru
      _
    %p117 = scmp.lt.s32.totalorder %s8, 2
    // Predicated region
    $region13: #{dice_loss.1} parent=5 // pred_check
      %p118 = pneg %p117
    $region14: #{dice_loss.1} parent=5 // pred_check_branch
      %120 = sbr.rel (%p118) target = $region16
    $region15: #{dice_loss.1} parent=5 // pred_region
      // Predicated region
      $region17: #{dice_loss.1} parent=15 // pred_check
        %p121 = pneg %p42
      $region18: #{dice_loss.1} parent=15 // pred_check_branch
        %123 = sbr.rel (%p121) target = $region20
      $region19: #{dice_loss.1} parent=15 // pred_region
        %p124 = scmp.lt.s32.totalorder %s15, 1
        %s125 = scalar_select %p124, %s15, 1
        %p126 = scmp.lt.s32.totalorder %s16, 0
        %s127 = scalar_select %p126, %s16, 0
        %s128 = smul.addr %s125, 4
        %s129 = sadd.s32 %s127, %s128
        %s130 = smul.addr %s129, 2
        %s131 = scalar_lea.vmem %s0, %s130
      $region20: #{dice_loss.1} parent=15 // pred_fallthru
        _
      // Predicated region
      $region21: #{dice_loss.1} parent=15 // pred_check
        %p132 = pneg %p70
      $region22: #{dice_loss.1} parent=15 // pred_check_branch
        %134 = sbr.rel (%p132) target = $region24
      $region23: #{dice_loss.1} parent=15 // pred_region
        %p135 = scmp.lt.s32.totalorder %s15, 1
        %s136 = scalar_select %p135, %s15, 1
        %p137 = scmp.lt.s32.totalorder %s16, 0
        %s138 = scalar_select %p137, %s16, 0
        %s139 = sadd.s32 %s138, %s136
        %s140 = smul.addr %s139, 2
        %s141 = scalar_lea.vmem %s1, %s140
      $region24: #{dice_loss.1} parent=15 // pred_fallthru
        _
    $region16: #{dice_loss.1} parent=5 // pred_fallthru
      _
    %p142 = scmp.le.s32.totalorder 1, %s8
    %p143 = scmp.lt.s32.totalorder %s8, 3
    %p144 = pnand %p142, %p143
    %p145 = pneg %p144
    // Predicated region
    $region25: #{dice_loss.1} parent=5 // pred_check
      _
    $region26: #{dice_loss.1} parent=5 // pred_check_branch
      %147 = sbr.rel (%p144) target = $region28
    $region27: #{dice_loss.1} parent=5 // pred_region
      %s148 = ssub.s32 %s8, 1
      %p149 = scmp.lt.s32.totalorder %s17, 1
      %s150 = scalar_select %p149, %s17, 1
      %p151 = scmp.lt.s32.totalorder %s18, 0
      %s152 = scalar_select %p151, %s18, 0
      %s153 = smul.addr %s150, 4
      %s154 = sadd.s32 %s152, %s153
      %s155 = smul.addr %s154, 2
      %s156 = scalar_lea.vmem %s0, %s155
      %p157 = pneg %p48
      %p158 = pneg %p45
      %p159 = scmp.lt.s32.totalorder %s17, 1
      %s160 = scalar_select %p159, %s17, 1
      %p161 = scmp.lt.s32.totalorder %s18, 0
      %s162 = scalar_select %p161, %s18, 0
      %s163 = sadd.s32 %s162, %s160
      %s164 = smul.addr %s163, 2
      %s165 = scalar_lea.vmem %s1, %s164
      %p166 = pneg %p76
      %p167 = pneg %p73
      %p168 = pneg %p102
      %p169 = pneg %p99
      %p170 = scmp.lt.s32.totalorder %s17, 1
      %s171 = scalar_select %p170, %s17, 1
      %s172 = smul.addr %s171, 8
      %s173 = smul.addr %s172, 2
      %s174 = scalar_lea.vmem %s2, %s173
      %p175 = scmp.lt.s32.totalorder %s17, 1
      %s176 = scalar_select %p175, %s17, 1
      %p177 = scmp.lt.s32.totalorder %s18, 0
      %s178 = scalar_select %p177, %s18, 0
      %s179 = smul.addr %s176, 4
      %s180 = sadd.s32 %s178, %s179
      %s181 = smul.addr %s180, 2
      %s182 = scalar_lea.vmem %s0, %s181
      %p183 = scmp.lt.s32.totalorder %s17, 1
      %s184 = scalar_select %p183, %s17, 1
      %p185 = scmp.lt.s32.totalorder %s18, 0
      %s186 = scalar_select %p185, %s18, 0
      %s187 = sadd.s32 %s186, %s184
      %s188 = smul.addr %s187, 2
      %s189 = scalar_lea.vmem %s1, %s188
      %p190 = scmp.lt.s32.totalorder %s17, 1
      %s191 = scalar_select %p190, %s17, 1
      %s192 = smul.addr %s191, 8
      %s193 = smul.addr %s192, 2
      %s194 = scalar_lea.vmem %s2, %s193
      %p195 = scmp.eq.s32.totalorder %s18, 0
      // Predicated region
      $region29: #{dice_loss.1} parent=27 // pred_check
        %p196 = pneg %p195
      $region30: #{dice_loss.1} parent=27 // pred_check_branch
        %198 = sbr.rel (%p196) target = $region32
      $region31: #{dice_loss.1} parent=27 // pred_region
        %199 = vst [vmem:[%s194] sm:$0x3] 0.0
        %200 = vst [vmem:[%s194 + $0x2] sm:$0x3] 0.0
        %201 = vst [vmem:[%s194 + $0x4] sm:$0x3] 0.0
        %202 = vst [vmem:[%s194 + $0x6] sm:$0x3] 0.0
        %203 = vst [vmem:[%s194 + $0x8] sm:$0x3] 0.0
        %204 = vst [vmem:[%s194 + $0xa] sm:$0x3] 0.0
        %205 = vst [vmem:[%s194 + $0xc] sm:$0x3] 0.0
        %206 = vst [vmem:[%s194 + $0xe] sm:$0x3] 0.0
      $region32: #{dice_loss.1} parent=27 // pred_fallthru
        _
      %v207 = vld [vmem:[%s182] sm:$0x3]
      %v208 = vld [vmem:[%s182 + $0x2] sm:$0x3]
      %v209 = vld [vmem:[%s182 + $0x4] sm:$0x3]
      %v210 = vld [vmem:[%s182 + $0x6] sm:$0x3]
      %v211 = vld [vmem:[%s189] sm:$0x3]
      %vm212 = vcmask 1041408
      %v213 = vsel %vm212, %v207, -inf
      %v214 = vsel %vm212, %v208, -inf
      %v215 = vsel %vm212, %v209, -inf
      %v216 = vsel %vm212, %v210, -inf
      %v217 = vmax.f32 %v213, %v214
      %v218 = vmax.f32 %v215, %v216
      %v219 = vmax.f32 %v217, %v218
      %v220 = vsub.f32 %v207, %v219
      %v221 = vsub.f32 %v208, %v219
      %v222 = vsub.f32 %v209, %v219
      %v223 = vsub.f32 %v210, %v219
      %v224 = vmul.f32 %v220, 1.442695
      %v225 = vpow.pop %v224
      %v226 = vmul.f32 %v221, 1.442695
      %v227 = vpow.pop %v226
      %v228 = vmul.f32 %v222, 1.442695
      %v229 = vpow.pop %v228
      %v230 = vmul.f32 %v223, 1.442695
      %v231 = vpow.pop %v230
      %v232 = vsel %vm212, %v225, 0.0
      %v233 = vsel %vm212, %v227, 0.0
      %v234 = vadd.f32 %v232, %v233
      %v235 = vsel %vm212, %v229, 0.0
      %v236 = vadd.f32 %v234, %v235
      %v237 = vsel %vm212, %v231, 0.0
      %v238 = vadd.f32 %v236, %v237
      %v239 = vrcp.pop %v238
      %v240 = vmul.f32 %v225, %v239
      %vm241 = vcmp.eq.s32.totalorder %v211, 0
      %v242 = vsel %vm241, %v240, 0.0
      %v243 = vsel %vm241, 1.0, 0.0
      %v244 = vadd.f32 %v240, %v243
      %v245 = vld [vmem:[%s194] sm:$0x3]
      %v246 = vadd.f32 %v245, %v242
      %247 = vst [vmem:[%s194] sm:$0x3] %v246
      %s248 = scalar_lea.vmem %s194, 8
      %v249 = vld [vmem:[%s248] sm:$0x3]
      %v250 = vadd.f32 %v249, %v244
      %251 = vst [vmem:[%s248] sm:$0x3] %v250
      %v252 = vmul.f32 %v227, %v239
      %vm253 = vcmp.eq.s32.totalorder %v211, 1
      %v254 = vsel %vm253, %v252, 0.0
      %v255 = vsel %vm253, 1.0, 0.0
      %v256 = vadd.f32 %v252, %v255
      %s257 = scalar_lea.vmem %s194, 2
      %v258 = vld [vmem:[%s257] sm:$0x3]
      %v259 = vadd.f32 %v258, %v254
      %260 = vst [vmem:[%s257] sm:$0x3] %v259
      %s261 = scalar_lea.vmem %s194, 10
      %v262 = vld [vmem:[%s261] sm:$0x3]
      %v263 = vadd.f32 %v262, %v256
      %264 = vst [vmem:[%s261] sm:$0x3] %v263
      %v265 = vmul.f32 %v229, %v239
      %vm266 = vcmp.eq.s32.totalorder %v211, 2
      %v267 = vsel %vm266, %v265, 0.0
      %v268 = vsel %vm266, 1.0, 0.0
      %v269 = vadd.f32 %v265, %v268
      %s270 = scalar_lea.vmem %s194, 4
      %v271 = vld [vmem:[%s270] sm:$0x3]
      %v272 = vadd.f32 %v271, %v267
      %273 = vst [vmem:[%s270] sm:$0x3] %v272
      %s274 = scalar_lea.vmem %s194, 12
      %v275 = vld [vmem:[%s274] sm:$0x3]
      %v276 = vadd.f32 %v275, %v269
      %277 = vst [vmem:[%s274] sm:$0x3] %v276
      %v278 = vmul.f32 %v231, %v239
      %vm279 = vcmp.eq.s32.totalorder %v211, 3
      %v280 = vsel %vm279, %v278, 0.0
      %v281 = vsel %vm279, 1.0, 0.0
      %v282 = vadd.f32 %v278, %v281
      %s283 = scalar_lea.vmem %s194, 6
      %v284 = vld [vmem:[%s283] sm:$0x3]
      %v285 = vadd.f32 %v284, %v280
      %286 = vst [vmem:[%s283] sm:$0x3] %v285
      %s287 = scalar_lea.vmem %s194, 14
      %v288 = vld [vmem:[%s287] sm:$0x3]
      %v289 = vadd.f32 %v288, %v282
      %290 = vst [vmem:[%s287] sm:$0x3] %v289
      %p291 = scmp.lt.s32.totalorder %s17, 1
      %s292 = scalar_select %p291, %s17, 1
      %s293 = smul.addr %s292, 8
      %s294 = smul.addr %s293, 2
      %s295 = scalar_lea.vmem %s2, %s294
      // Predicated region
      $region33: #{dice_loss.1} parent=27 // pred_check
        %p296 = pneg %p99
      $region34: #{dice_loss.1} parent=27 // pred_check_branch
        %298 = sbr.rel (%p296) target = $region36
      $region35: #{dice_loss.1} parent=27 // pred_region
        _
      $region36: #{dice_loss.1} parent=27 // pred_fallthru
        _
    $region28: #{dice_loss.1} parent=5 // pred_fallthru
      _
    %p299 = scmp.le.s32.totalorder 2, %s8
    // Predicated region
    $region37: #{dice_loss.1} parent=5 // pred_check
      %p300 = pneg %p299
    $region38: #{dice_loss.1} parent=5 // pred_check_branch
      %302 = sbr.rel (%p300) target = $region40
    $region39: #{dice_loss.1} parent=5 // pred_region
      %s303 = ssub.s32 %s8, 2
      // Predicated region
      $region41: #{dice_loss.1} parent=39 // pred_check
        %p304 = pneg %p105
      $region42: #{dice_loss.1} parent=39 // pred_check_branch
        %306 = sbr.rel (%p304) target = $region44
      $region43: #{dice_loss.1} parent=39 // pred_region
        %p307 = scmp.lt.s32.totalorder %s19, 1
        %s308 = scalar_select %p307, %s19, 1
        %s309 = smul.addr %s308, 8
        %s310 = smul.addr %s309, 2
        %s311 = scalar_lea.vmem %s2, %s310
      $region44: #{dice_loss.1} parent=39 // pred_fallthru
        _
    $region40: #{dice_loss.1} parent=5 // pred_fallthru
      _
  $region6: #{dice_loss.1} parent=0 // loop_footer
    %s12 = sadd.s32 1, %s8
  $region7: #{dice_loss.1} parent=0 // loop_footer_branch
    %7 = sbr.rel target = $region3
  $region8: #{dice_loss.1} parent=0 // loop_exit
    _

</llo_original>
